<compile_context>
chip_gen: v7x
topology: tpu7x:2x2x1
jax: 0.10.0
libtpu: 0.0.40
codegen_flags: <defaults>
</compile_context>

<pallas_src>
import functools
import math

import jax
import jax.numpy as jnp
from jax import lax
from jax.experimental import pallas as pl
from jax.experimental.pallas import tpu as pltpu


def _cdiv(a, b):
    return (a + b - 1) // b


def _round_up(a, b):
    return _cdiv(a, b) * b


@functools.lru_cache(maxsize=None)
def _vmem_limit_bytes():
    # Generation-aware VMEM cap: ~75% of physical per-core VMEM so the compiler
    # keeps headroom for internal scratch (v7x: ~48 MiB, v5e/v6e: ~96 MiB).
    try:
        return int(pltpu.get_tpu_info().vmem_capacity_bytes * 0.75)
    except Exception:
        return 64 * 1024 * 1024


def _pad_to(x, axis, target):
    """Zero-pad `x` along `axis` up to length `target` (no-op if already there)."""
    size = x.shape[axis]
    if size == target:
        return x
    pad = [(0, 0)] * x.ndim
    pad[axis] = (0, target - size)
    return jnp.pad(x, pad)


def _pick_seq_tile(S, preferred):
    """Largest sequence tile <= preferred that divides S (multiple of 8)."""
    if S <= preferred:
        return S
    if S % preferred == 0:
        return preferred
    for t in range(preferred - preferred % 8, 7, -8):
        if S % t == 0:
            return t
    return S


# ----------------------------------------------------------------------------
# Projection kernel: (1, ts, Dm) @ (Dm, Dout) -> (1, ts, Dout), bf16 MXU inputs
# ----------------------------------------------------------------------------
def _proj_kernel(x_ref, w_ref, o_ref):
    # x_ref / w_ref are already bf16 (cast in the wrapper); f32 MXU accumulation.
    o_ref[0] = jnp.dot(
        x_ref[0], w_ref[...], preferred_element_type=jnp.float32
    ).astype(o_ref.dtype)


def _project(x, w_t, *, seq_tile=512):
    """x: (B, S, Dm) bf16, w_t: (Dm, Dout) bf16 -> x @ w_t as bf16."""
    B, S, Dm = x.shape
    Dout = w_t.shape[1]
    ts = _pick_seq_tile(S, seq_tile)
    cost = pl.CostEstimate(
        flops=2 * B * S * Dm * Dout,
        transcendentals=0,
        bytes_accessed=2 * B * S * Dm + 2 * Dm * Dout + 2 * B * S * Dout,
    )
    return pl.pallas_call(
        _proj_kernel,
        out_shape=jax.ShapeDtypeStruct((B, S, Dout), jnp.bfloat16),
        grid_spec=pltpu.PrefetchScalarGridSpec(
            num_scalar_prefetch=0,
            grid=(B, S // ts),
            in_specs=[
                pl.BlockSpec((1, ts, Dm), lambda b, s: (b, s, 0)),
                # Constant index_map: the weight block stays resident across the
                # grid and is not re-DMA'd per step.
                # TODO(synk): pipeline_mode=pl.Buffered(1) (newer JAX) would also
                # drop the redundant second weight buffer.
                pl.BlockSpec((Dm, Dout), lambda b, s: (0, 0)),
            ],
            out_specs=pl.BlockSpec((1, ts, Dout), lambda b, s: (b, s, 0)),
        ),
        compiler_params=pltpu.CompilerParams(
            dimension_semantics=("parallel", "parallel"),
            vmem_limit_bytes=_vmem_limit_bytes(),
        ),
        cost_estimate=cost,
    )(x, w_t)


# ----------------------------------------------------------------------------
# Flash-style attention kernel with online softmax (+ padded-key masking)
# ----------------------------------------------------------------------------
def _flash_attention_kernel(qp_ref, kp_ref, vp_ref, o_ref, m_sc, l_sc, acc_sc,
                            *, kv_tile, kv_len):
    # qp_ref: (1, tq, Dkp) bf16 (already scaled by 1/sqrt(d_k))
    # kp_ref: (1, tk, Dkp) bf16   vp_ref: (1, tk, Dvp) bf16
    # o_ref : (1, tq, Dvp) bf16
    kv = pl.program_id(2)

    @pl.when(kv == 0)
    def _():
        m_sc[...] = jnp.full_like(m_sc, -jnp.inf)
        l_sc[...] = jnp.zeros_like(l_sc)
        acc_sc[...] = jnp.zeros_like(acc_sc)

    q = qp_ref[0]
    k = kp_ref[0]
    v = vp_ref[0]

    # logits tile: 'qd,kd->qk' straight to the MXU, no explicit k.T transpose.
    s = lax.dot_general(
        q, k, dimension_numbers=(((1,), (1,)), ((), ())),
        preferred_element_type=jnp.float32,
    )                                                      # (tq, tk) f32

    if kv_len % kv_tile != 0:
        # Mask zero-padded tail keys.  Only the last kv tile contains padding
        # and it always holds >= 1 real key, so m_new stays finite (no NaN).
        key_idx = kv * kv_tile + lax.broadcasted_iota(jnp.int32, (1, kv_tile), 1)
        s = jnp.where(key_idx < kv_len, s, -jnp.inf)

    # Online softmax update (fp32 math on VPU/EUP).
    m_prev = m_sc[...]
    m_new = jnp.maximum(m_prev, jnp.max(s, axis=-1, keepdims=True))
    alpha = jnp.exp(m_prev - m_new)
    p = jnp.exp(s - m_new)
    l_sc[...] = alpha * l_sc[...] + jnp.sum(p, axis=-1, keepdims=True)
    acc_sc[...] = alpha * acc_sc[...] + jnp.dot(
        p.astype(v.dtype), v, preferred_element_type=jnp.float32)  # bf16 MXU, f32 acc
    m_sc[...] = m_new

    @pl.when(kv == pl.num_programs(2) - 1)
    def _():
        inv_l = pl.reciprocal(l_sc[...], approx=True)       # EUP vrcp slot
        o_ref[0] = (acc_sc[...] * inv_l).astype(o_ref.dtype)


def single_head_attention(Q, K, V, W_Q, W_K, W_V, *, q_tile=512, kv_tile=512):
    """Q: (B, Sq, Dm); K, V: (B, Sk, Dm); W_*: (out, in) torch.nn.Linear layout."""
    B, Sq, Dm = Q.shape
    _, Sk, _ = K.shape
    Dk = W_Q.shape[0]
    Dv = W_V.shape[0]

    # --- Weight prep (host side, f32): (out, in) -> (in, out), fold 1/sqrt(d_k)
    # into W_Q, zero-pad output features to multiples of 128 (lane-dense stores,
    # full MXU N width), cast to bf16 once (halves weight DMA traffic).
    scale = 1.0 / math.sqrt(float(Dk))
    Dkp = _round_up(Dk, 128)
    Dvp = _round_up(Dv, 128)
    wq_t = _pad_to(W_Q.T * scale, 1, Dkp).astype(jnp.bfloat16)
    wk_t = _pad_to(W_K.T, 1, Dkp).astype(jnp.bfloat16)
    wv_t = _pad_to(W_V.T, 1, Dvp).astype(jnp.bfloat16)

    # --- Tile selection + sequence padding (tiles are multiples of 8).
    tq = q_tile if Sq > q_tile else _round_up(Sq, 8)
    # Keep at least 2 "parallel" grid steps so both v7x TensorCores get work.
    while B * _cdiv(Sq, tq) < 2 and tq > 8 and tq % 16 == 0:
        tq //= 2
    tk = kv_tile if Sk > kv_tile else _round_up(Sk, 8)
    Sq_p = _round_up(Sq, tq)
    Sk_p = _round_up(Sk, tk)

    # --- Activations: cast to bf16 in the wrapper (halves projection-input HBM
    # traffic and VMEM footprint) and zero-pad the sequence to the tile grid.
    q_in = _pad_to(Q.astype(jnp.bfloat16), 1, Sq_p)
    k_in = _pad_to(K.astype(jnp.bfloat16), 1, Sk_p)
    v_in = _pad_to(V.astype(jnp.bfloat16), 1, Sk_p)

    # Projections hoisted out of the attention tiling (done once, not per q-tile).
    q_p = _project(q_in, wq_t)   # (B, Sq_p, Dkp) bf16, pre-scaled
    k_p = _project(k_in, wk_t)   # (B, Sk_p, Dkp) bf16
    v_p = _project(v_in, wv_t)   # (B, Sk_p, Dvp) bf16

    n_q = Sq_p // tq
    n_kv = Sk_p // tk
    cost = pl.CostEstimate(
        flops=2 * B * Sq_p * Sk_p * (Dkp + Dvp),
        transcendentals=B * Sq_p * Sk_p,
        bytes_accessed=(2 * B * Sq_p * Dkp                   # Q read once
                        + 2 * B * n_q * Sk_p * (Dkp + Dvp)   # K/V re-read per q tile
                        + 2 * B * Sq_p * Dvp),                # bf16 output write
    )

    out = pl.pallas_call(
        functools.partial(_flash_attention_kernel, kv_tile=tk, kv_len=Sk),
        out_shape=jax.ShapeDtypeStruct((B, Sq_p, Dvp), jnp.bfloat16),
        grid_spec=pltpu.PrefetchScalarGridSpec(
            num_scalar_prefetch=0,
            grid=(B, n_q, n_kv),
            in_specs=[
                pl.BlockSpec((1, tq, Dkp), lambda b, qi, ki: (b, qi, 0)),
                pl.BlockSpec((1, tk, Dkp), lambda b, qi, ki: (b, ki, 0)),
                pl.BlockSpec((1, tk, Dvp), lambda b, qi, ki: (b, ki, 0)),
            ],
            out_specs=pl.BlockSpec((1, tq, Dvp), lambda b, qi, ki: (b, qi, 0)),
            scratch_shapes=[
                pltpu.VMEM((tq, 1), jnp.float32),    # m (running max)
                pltpu.VMEM((tq, 1), jnp.float32),    # l (running denom)
                pltpu.VMEM((tq, Dvp), jnp.float32),  # acc (unnormalized output)
            ],
        ),
        compiler_params=pltpu.CompilerParams(
            dimension_semantics=("parallel", "parallel", "arbitrary"),
            vmem_limit_bytes=_vmem_limit_bytes(),
        ),
        cost_estimate=cost,
    )(q_p, k_p, v_p)

    # Strip sequence / feature padding (bf16 output; acc was f32 in VMEM).
    return out[:, :Sq, :Dv]


def _reference(Q, K, V, W_Q, W_K, W_V):
    q_p = Q @ W_Q.T
    k_p = K @ W_K.T
    v_p = V @ W_V.T
    d_k = q_p.shape[-1]
    logits = jnp.einsum("bqd,bkd->bqk", q_p, k_p) / jnp.sqrt(jnp.float32(d_k))
    att = jax.nn.softmax(logits, axis=-1)
    return jnp.einsum("bqk,bkd->bqd", att, v_p)


if __name__ == "__main__":
    # Small shapes consistent with the module.
    batch, seq, d_model, d_k, d_v = 2, 8, 32, 16, 16

    key = jax.random.PRNGKey(0)
    kq, kk, kvv, kwq, kwk, kwv = jax.random.split(key, 6)

    Q = jax.random.normal(kq, (batch, seq, d_model), dtype=jnp.float32)
    K = jax.random.normal(kk, (batch, seq, d_model), dtype=jnp.float32)
    V = jax.random.normal(kvv, (batch, seq, d_model), dtype=jnp.float32)

    # nn.Linear-style uniform(-1/sqrt(in), 1/sqrt(in)) init, (out, in) layout.
    bound = 1.0 / math.sqrt(d_model)
    W_Q = jax.random.uniform(kwq, (d_k, d_model), jnp.float32, -bound, bound)
    W_K = jax.random.uniform(kwk, (d_k, d_model), jnp.float32, -bound, bound)
    W_V = jax.random.uniform(kwv, (d_v, d_model), jnp.float32, -bound, bound)

    out = single_head_attention(Q, K, V, W_Q, W_K, W_V)
    out = jax.block_until_ready(out)

    ref = _reference(Q, K, V, W_Q, W_K, W_V)
    assert out.shape == (batch, seq, d_v)
    # bf16 MXU inputs / bf16 output (f32 accumulation) + approx reciprocal ->
    # looser tolerance than an f32-exact softmax.
    assert jnp.allclose(out.astype(jnp.float32), ref, atol=3e-2, rtol=3e-2), \
        "mismatch vs reference"

    print("KERNEL_OK")
</pallas_src>

<mosaic_0001>
module attributes {stable_mosaic.version = 11 : i64} {
  func.func @_proj_kernel(%arg0: i32, %arg1: i32, %arg2: memref<1x8x32xbf16, #tpu.memory_space<vmem>>, %arg3: memref<32x128xbf16, #tpu.memory_space<vmem>>, %arg4: memref<1x8x128xbf16, #tpu.memory_space<vmem>>) attributes {dimension_semantics = [#tpu.dimension_semantics<parallel>, #tpu.dimension_semantics<parallel>], iteration_bounds = array<i64: 2, 1>, scalar_prefetch = 0 : i64, scratch_operands = 0 : i64, tpu.core_type = #tpu.core_type<tc>, window_params = [{transform_indices = @transform_0, window_bounds = array<i64: 1, 8, 32>}, {pipeline_mode = #tpu.pipeline_mode<synchronous>, transform_indices = @transform_1, window_bounds = array<i64: 32, 128>}, {transform_indices = @transform_2, window_bounds = array<i64: 1, 8, 128>}]} {
    %c0 = arith.constant 0 : index
    %c0_0 = arith.constant 0 : index
    %c0_1 = arith.constant 0 : index
    %0 = vector.load %arg2[%c0, %c0_0, %c0_1] : memref<1x8x32xbf16, #tpu.memory_space<vmem>>, vector<1x8x32xbf16>
    %1 = vector.shape_cast %0 : vector<1x8x32xbf16> to vector<8x32xbf16>
    %c0_2 = arith.constant 0 : index
    %c0_3 = arith.constant 0 : index
    %2 = vector.load %arg3[%c0_2, %c0_3] : memref<32x128xbf16, #tpu.memory_space<vmem>>, vector<32x128xbf16>
    %cst = arith.constant dense<0.000000e+00> : vector<8x128xf32>
    %3 = tpu.matmul %1, %2, %cst {dimension_numbers = #tpu.dot_dimension_numbers<[1], [0], [0], [1], [0, 0, 1, 1], [], []>} : vector<8x32xbf16>, vector<32x128xbf16>, vector<8x128xf32> -> vector<8x128xf32>
    %4 = arith.truncf %3 : vector<8x128xf32> to vector<8x128xbf16>
    %c0_4 = arith.constant 0 : index
    %c0_5 = arith.constant 0 : index
    %c0_6 = arith.constant 0 : index
    %5 = vector.load %arg4[%c0_4, %c0_5, %c0_6] : memref<1x8x128xbf16, #tpu.memory_space<vmem>>, vector<1x8x128xbf16>
    %6 = vector.shape_cast %5 : vector<1x8x128xbf16> to vector<8x128xbf16>
    %7 = vector.shape_cast %4 : vector<8x128xbf16> to vector<1x8x128xbf16>
    tpu.vector_store %arg4[%c0_4, %c0_5, %c0_6], %7 {strides = array<i32>} : memref<1x8x128xbf16, #tpu.memory_space<vmem>>, vector<1x8x128xbf16>,
    return
  }
  func.func @transform_0(%arg0: i32, %arg1: i32) -> (i32, i32, i32) {
    %c0_i32 = arith.constant 0 : i32
    %c0_i32_0 = arith.constant 0 : i32
    return %arg0, %arg1, %c0_i32 : i32, i32, i32
  }
  func.func @transform_1(%arg0: i32, %arg1: i32) -> (i32, i32) {
    %c0_i32 = arith.constant 0 : i32
    %c0_i32_0 = arith.constant 0 : i32
    %c0_i32_1 = arith.constant 0 : i32
    return %c0_i32, %c0_i32_0 : i32, i32
  }
  func.func @transform_2(%arg0: i32, %arg1: i32) -> (i32, i32, i32) {
    %c0_i32 = arith.constant 0 : i32
    %c0_i32_0 = arith.constant 0 : i32
    return %arg0, %arg1, %c0_i32 : i32, i32, i32
  }
}

</mosaic_0001>

<llo_original>
// kernel: tpu_custom_call.1
$region0: #{tpu_custom_call.1}
  #allocation0 [shape = 'u32[]', space=smem, size = 0x4, offset = 0x4, fixed_abs, tag = 'smem constant byte address 0x4 - core index']
  #allocation1 [shape = 'u32[144,128]{1,0:T(1,128)}', space=vmem, size = 0x12000, scoped, tag = 'internal scratch']
  %s0 = inlined_call_operand.hbm [shape: bf16[2,8,32], index: 0, kind: input, shape index: {}]
  %s1 = inlined_call_operand.hbm [shape: bf16[32,128], index: 1, kind: input, shape index: {}]
  %s2 = inlined_call_operand.hbm [shape: bf16[2,8,128], index: 2, kind: output, shape index: {}]
  %s3 = sld [smem:[#allocation0]]
  $region49: #{tpu_custom_call.1} parent=0
    _
  %s5 = ssub.s32 1, %s3
  %s6 = scalar_select 0, %s5, %s3
  $region1: #{tpu_custom_call.1} parent=0
    #allocation2 [shape = 'u8[4096]{0}', space=vmem, size = 0x1000, scoped, tag = 'input window, operand 0']
    #allocation3 [shape = 's32[2]{0}', space=sflag, size = 0x8, scoped, tag = 'scoped memory for tpu_custom_call.1']
    #allocation4 [shape = 's32[2]{0}', space=sflag, size = 0x8, scoped, tag = 'scoped memory for tpu_custom_call.1']
    #allocation5 [shape = 'u8[8192]{0}', space=vmem, size = 0x2000, scoped, tag = 'input window, operand 1, single buffered']
    #allocation6 [shape = 's32[1]{0}', space=sflag, size = 0x4, scoped, tag = 'scoped memory for tpu_custom_call.1']
    #allocation7 [shape = 'u8[4096]{0}', space=vmem, size = 0x1000, scoped, tag = 'output window, operand 0']
    %7 = vsyncpa [#allocation3], 0
    %s8 = scalar_lea.sflag [#allocation3], 1
    %9 = vsyncpa %s8, 0
    %10 = vsyncpa [#allocation6], 0
    %11 = vsyncpa [#allocation4], 0
    %s12 = scalar_lea.sflag [#allocation4], 1
    %13 = vsyncpa %s12, 0
    loop: start=0, step=1, limit=4
    $region2: #{tpu_custom_call.1} parent=1 // loop_pre_header
      _
    $region3: #{tpu_custom_call.1} parent=1 // loop_header
      %s15 = sphi 0, %s19
      %p16 = scmp.ge.s32.totalorder %s15, 4
      %s22 = sphi 0, %s34
      %s23 = sphi 0, %s30
      %s24 = sphi 0, %s22
      %s25 = sphi 0, %s23
      %s26 = sphi 0, %s24
      %s27 = sphi 0, %s25
      %s39 = sphi 0, %s41
      %s42 = sphi 0, %s39
      %s43 = sphi 0, %s42
      %s59 = sphi 0, %s43
      %s63 = sphi 0, %s63
      %s65 = sphi 0, %s63
      %s66 = sphi 0, %s65
      %s80 = sphi 0, %s66
      %s88 = sphi 0, %s90
      %s91 = sphi 0, %s88
      %s92 = sphi 0, %s91
      %s108 = sphi 0, %s92
    $region4: #{tpu_custom_call.1} parent=1 // loop_header_branch
      %18 = sbr.rel (%p16) target = $region8
    $region5: #{tpu_custom_call.1} parent=1 // loop_body
      %s20 = ssub.s32 %s15, 1
      %s21 = ssub.s32 %s15, 2
      %s28 = sadd.s32 1, %s23
      %p29 = scmp.ge.s32.totalorder %s28, 1
      %s30 = scalar_select %p29, 0, %s28
      %s31 = sadd.s32 1, %s22
      %s32 = scalar_select %p29, %s31, %s22
      %p33 = scmp.ge.s32.totalorder %s32, 2
      %s34 = scalar_select %p33, 0, %s32
      %s35 = ssub.s32 %s22, %s34
      %s36 = ssub.s32 %s23, %s30
      %s37 = sor.u32 %s35, %s36
      %p38 = scmp.eq.s32.totalorder %s37, 0
      %s40 = sadd.s32 %s39, 1
      %s41 = scalar_select %p38, %s39, %s40
      %p44 = pneg %p38
      %p45 = scmp.eq.s32.totalorder %s15, 1
      %p46 = por %p44, %p45
      %p47 = scmp.ne.s32.totalorder %s39, %s42
      %p48 = scmp.eq.s32.totalorder %s15, 0
      %p49 = por %p47, %p48
      %p50 = scmp.ne.s32.totalorder %s39, %s42
      %p51 = scmp.eq.s32.totalorder %s20, 1
      %p52 = por %p50, %p51
      %p53 = scmp.ne.s32.totalorder %s42, %s43
      %p54 = scmp.eq.s32.totalorder %s20, 0
      %p55 = por %p53, %p54
      %p56 = scmp.ne.s32.totalorder %s42, %s43
      %p57 = scmp.eq.s32.totalorder %s21, 1
      %p58 = por %p56, %p57
      %p60 = scmp.ne.s32.totalorder %s43, %s59
      %p61 = scmp.eq.s32.totalorder %s21, 0
      %p62 = por %p60, %p61
      %s64 = sadd.s32 %s63, 1
      %p67 = scmp.eq.s32.totalorder %s15, 1
      %p68 = scmp.ne.s32.totalorder %s63, %s65
      %p69 = scmp.eq.s32.totalorder %s15, 0
      %p70 = por %p68, %p69
      %p71 = scmp.ne.s32.totalorder %s63, %s65
      %p72 = scmp.eq.s32.totalorder %s20, 1
      %p73 = por %p71, %p72
      %p74 = scmp.ne.s32.totalorder %s65, %s66
      %p75 = scmp.eq.s32.totalorder %s20, 0
      %p76 = por %p74, %p75
      %p77 = scmp.ne.s32.totalorder %s65, %s66
      %p78 = scmp.eq.s32.totalorder %s21, 1
      %p79 = por %p77, %p78
      %p81 = scmp.ne.s32.totalorder %s66, %s80
      %p82 = scmp.eq.s32.totalorder %s21, 0
      %p83 = por %p81, %p82
      %s84 = ssub.s32 %s22, %s34
      %s85 = ssub.s32 %s23, %s30
      %s86 = sor.u32 %s84, %s85
      %p87 = scmp.eq.s32.totalorder %s86, 0
      %s89 = sadd.s32 %s88, 1
      %s90 = scalar_select %p87, %s88, %s89
      %p93 = pneg %p87
      %p94 = scmp.eq.s32.totalorder %s15, 1
      %p95 = por %p93, %p94
      %p96 = scmp.ne.s32.totalorder %s88, %s91
      %p97 = scmp.eq.s32.totalorder %s15, 0
      %p98 = por %p96, %p97
      %p99 = scmp.ne.s32.totalorder %s88, %s91
      %p100 = scmp.eq.s32.totalorder %s20, 1
      %p101 = por %p99, %p100
      %p102 = scmp.ne.s32.totalorder %s91, %s92
      %p103 = scmp.eq.s32.totalorder %s20, 0
      %p104 = por %p102, %p103
      %p105 = scmp.ne.s32.totalorder %s91, %s92
      %p106 = scmp.eq.s32.totalorder %s21, 1
      %p107 = por %p105, %p106
      %p109 = scmp.ne.s32.totalorder %s92, %s108
      %p110 = scmp.eq.s32.totalorder %s21, 0
      %p111 = por %p109, %p110
      %p112 = scmp.le.s32.totalorder 1, %s15
      %p113 = scmp.lt.s32.totalorder %s15, 3
      %p114 = pnand %p112, %p113
      %p115 = pneg %p114
      // Predicated region
      $region9: #{tpu_custom_call.1} parent=5 // pred_check
        _
      $region10: #{tpu_custom_call.1} parent=5 // pred_check_branch
        %117 = sbr.rel (%p114) target = $region12
      $region11: #{tpu_custom_call.1} parent=5 // pred_region
        %s118 = ssub.s32 %s15, 1
        // Predicated region
        $region13: #{tpu_custom_call.1} parent=11 // pred_check
          %p119 = pneg %p76
        $region14: #{tpu_custom_call.1} parent=11 // pred_check_branch
          %121 = sbr.rel (%p119) target = $region16
        $region15: #{tpu_custom_call.1} parent=11 // pred_region
          %s123 = ssub.s32 256, 256
          %124 = vsyncadd [#allocation6], %s123
          %s125 = sshll.u32 [#allocation5], 4
          %s126 = int_to_ptr.vmem [resolvable:$true] %s125
          %131 = dma.hbm_to_vmem [thread:$0]  %s1, 256, %s126, [#allocation6], 64, 64, 4
        $region16: #{tpu_custom_call.1} parent=11 // pred_fallthru
          _
      $region12: #{tpu_custom_call.1} parent=5 // pred_fallthru
        _
      %p132 = scmp.lt.s32.totalorder %s15, 2
      // Predicated region
      $region17: #{tpu_custom_call.1} parent=5 // pred_check
        %p133 = pneg %p132
      $region18: #{tpu_custom_call.1} parent=5 // pred_check_branch
        %135 = sbr.rel (%p133) target = $region20
      $region19: #{tpu_custom_call.1} parent=5 // pred_region
        // Predicated region
        $region21: #{tpu_custom_call.1} parent=19 // pred_check
          %p136 = pneg %p49
        $region22: #{tpu_custom_call.1} parent=19 // pred_check_branch
          %138 = sbr.rel (%p136) target = $region24
        $region23: #{tpu_custom_call.1} parent=19 // pred_region
          %s139 = sand.u32 %s39, 1
          %s140 = scalar_lea.sflag [#allocation3], %s139
          %s141 = sand.u32 %s39, 1
          %s142 = smul.addr %s141, 4
          %s143 = scalar_lea.vmem [#allocation2], %s142
          %s145 = ssub.s32 64, 64
          %146 = vsyncadd %s140, %s145
          %s147 = sadd.s32 %s23, %s22
          %s148 = smul.addr %s147, 64
          %s149 = scalar_lea.hbm %s0, %s148
          %s151 = sshll.u32 %s143, 4
          %s152 = int_to_ptr.vmem [resolvable:$true] %s151
          %154 = dma.hbm_to_vmem [thread:$0]  %s149, 64, %s152, %s140
        $region24: #{tpu_custom_call.1} parent=19 // pred_fallthru
          _
      $region20: #{tpu_custom_call.1} parent=5 // pred_fallthru
        _
      %p155 = scmp.le.s32.totalorder 1, %s15
      %p156 = scmp.lt.s32.totalorder %s15, 3
      %p157 = pnand %p155, %p156
      %p158 = pneg %p157
      // Predicated region
      $region25: #{tpu_custom_call.1} parent=5 // pred_check
        _
      $region26: #{tpu_custom_call.1} parent=5 // pred_check_branch
        %160 = sbr.rel (%p157) target = $region28
      $region27: #{tpu_custom_call.1} parent=5 // pred_region
        %s161 = ssub.s32 %s15, 1
        %s162 = sand.u32 %s42, 1
        %s163 = scalar_lea.sflag [#allocation3], %s162
        %s164 = sand.u32 %s42, 1
        %s165 = smul.addr %s164, 4
        %s166 = scalar_lea.vmem [#allocation2], %s165
        // Predicated region
        $region29: #{tpu_custom_call.1} parent=27 // pred_check
          %p167 = pneg %p55
        $region30: #{tpu_custom_call.1} parent=27 // pred_check_branch
          %169 = sbr.rel (%p167) target = $region32
        $region31: #{tpu_custom_call.1} parent=27 // pred_region
          %170 = dma.done %s163, 64
        $region32: #{tpu_custom_call.1} parent=27 // pred_fallthru
          _
        // Predicated region
        $region33: #{tpu_custom_call.1} parent=27 // pred_check
          %p171 = pneg %p76
        $region34: #{tpu_custom_call.1} parent=27 // pred_check_branch
          %173 = sbr.rel (%p171) target = $region36
        $region35: #{tpu_custom_call.1} parent=27 // pred_region
          %174 = dma.done [#allocation6], 256
        $region36: #{tpu_custom_call.1} parent=27 // pred_fallthru
          _
        %s175 = sand.u32 %s42, 1
        %s176 = scalar_lea.sflag [#allocation3], %s175
        %s177 = sand.u32 %s42, 1
        %s178 = smul.addr %s177, 4
        %s179 = scalar_lea.vmem [#allocation2], %s178
        %p180 = pneg %p55
        %p181 = pneg %p52
        %p182 = pneg %p76
        %p183 = pneg %p73
        %p184 = pneg %p104
        %p185 = pneg %p101
        %s186 = sand.u32 %s91, 1
        %s187 = scalar_lea.sflag [#allocation4], %s186
        %s188 = sand.u32 %s91, 1
        %s189 = smul.addr %s188, 4
        %s190 = scalar_lea.vmem [#allocation7], %s189
        %v192 = vld [vmem:[%s166] sm:$0xf]
        %v193 = vld [vmem:[#allocation5] sm:$0xf]
        %v194 = vld [vmem:[#allocation5 + $0x4] sm:$0xf]
        %v195 = vld [vmem:[#allocation5 + $0x8] sm:$0xf]
        %v196 = vld [vmem:[#allocation5 + $0xc] sm:$0xf]
        %v201 = vunpack.c.l.b16 %v193
        %v202 = vunpack.c.l.b16 %v194
        %v203 = vunpack.c.l.b16 %v195
        %v204 = vunpack.c.l.b16 %v196
        %v205 = vpack.c.b16 %v202, %v201
        %v206 = vpack.c.b16 %v204, %v203
        %vm209 = vcmask 261120
        %v211 = vsel %vm209, %v192, 0
        %213 = vmatprep.subr.bf16.mxu0 0
        %214 = vmatpush1.bf16.msra.mxu0 %v205
        %215 = vmatprep.subr.bf16.mxu0 0
        %216 = vmatpush1.bf16.msra.mxu0 %v206
        %217 = vmatprep.subr.bf16.mxu0 0
        %218 = vmatpush1.bf16.msra.mxu0 0
        %219 = vmatprep.subr.bf16.mxu0 0
        %220 = vmatpush1.bf16.msra.mxu0 0
        %221 = vmatprep.subr.bf16.mxu0 0
        %222 = vmatpush1.bf16.msra.mxu0 0
        %223 = vmatprep.subr.bf16.mxu0 0
        %224 = vmatpush1.bf16.msra.mxu0 0
        %225 = vmatprep.subr.bf16.mxu0 0
        %226 = vmatpush1.bf16.msra.mxu0 0
        %227 = vmatprep.subr.bf16.mxu0 0
        %228 = vmatpush1.bf16.msra.mxu0 0
        %229 = vmatprep.subr.bf16.mxu0 0
        %230 = vmatpush1.bf16.msra.mxu0 0
        %231 = vmatprep.subr.bf16.mxu0 0
        %232 = vmatpush1.bf16.msra.mxu0 0
        %233 = vmatprep.subr.bf16.mxu0 0
        %234 = vmatpush1.bf16.msra.mxu0 0
        %235 = vmatprep.subr.bf16.mxu0 0
        %236 = vmatpush1.bf16.msra.mxu0 0
        %237 = vmatprep.subr.bf16.mxu0 0
        %238 = vmatpush1.bf16.msra.mxu0 0
        %239 = vmatprep.subr.bf16.mxu0 0
        %240 = vmatpush1.bf16.msra.mxu0 0
        %241 = vmatprep.subr.bf16.mxu0 0
        %242 = vmatpush1.bf16.msra.mxu0 0
        %243 = vmatprep.subr.bf16.mxu0 0
        %244 = vmatpush1.bf16.msra.mxu0 0
        %245 = vmatprep.mubr.bf16.mxu0 0
        %246 = vmatmul.mubr.bf16.gmra.mrb[0].mxu0 %v211
        %v247 = vpop.f32.mrb[0].mxu0
        %v248 = vadd.f32 0.0, %v247
        %v249 = vpop.f32.mrb[0].mxu0
        %v250 = vpop.f32.mrb[0].mxu0
        %v251 = vpop.f32.mrb[0].mxu0
        %252 = vdwg.mxu0
        %v253 = vpack.c.bf16 %v248, %v248
        %254 = vst [vmem:[%s190] sm:$0xf] %v253
        %s255 = sand.u32 %s91, 1
        %s256 = scalar_lea.sflag [#allocation4], %s255
        %s257 = sand.u32 %s91, 1
        %s258 = smul.addr %s257, 4
        %s259 = scalar_lea.vmem [#allocation7], %s258
        // Predicated region
        $region37: #{tpu_custom_call.1} parent=27 // pred_check
          %p260 = pneg %p101
        $region38: #{tpu_custom_call.1} parent=27 // pred_check_branch
          %262 = sbr.rel (%p260) target = $region40
        $region39: #{tpu_custom_call.1} parent=27 // pred_region
          %s264 = ssub.s32 64, 64
          %265 = vsyncadd %s256, %s264
          %s266 = sadd.s32 %s25, %s24
          %s267 = smul.addr %s266, 64
          %s268 = scalar_lea.hbm %s2, %s267
          %s270 = sshll.u32 %s259, 4
          %s271 = int_to_ptr.vmem [resolvable:$true] %s270
          %273 = dma.vmem_to_hbm [thread:$0]  %s271, 64, %s268, %s256
        $region40: #{tpu_custom_call.1} parent=27 // pred_fallthru
          _
      $region28: #{tpu_custom_call.1} parent=5 // pred_fallthru
        _
      %p274 = scmp.le.s32.totalorder 2, %s15
      // Predicated region
      $region41: #{tpu_custom_call.1} parent=5 // pred_check
        %p275 = pneg %p274
      $region42: #{tpu_custom_call.1} parent=5 // pred_check_branch
        %277 = sbr.rel (%p275) target = $region44
      $region43: #{tpu_custom_call.1} parent=5 // pred_region
        %s278 = ssub.s32 %s15, 2
        // Predicated region
        $region45: #{tpu_custom_call.1} parent=43 // pred_check
          %p279 = pneg %p107
        $region46: #{tpu_custom_call.1} parent=43 // pred_check_branch
          %281 = sbr.rel (%p279) target = $region48
        $region47: #{tpu_custom_call.1} parent=43 // pred_region
          %s282 = sand.u32 %s92, 1
          %s283 = scalar_lea.sflag [#allocation4], %s282
          %s284 = sand.u32 %s92, 1
          %s285 = smul.addr %s284, 4
          %s286 = scalar_lea.vmem [#allocation7], %s285
          %287 = dma.done %s283, 64
        $region48: #{tpu_custom_call.1} parent=43 // pred_fallthru
          _
      $region44: #{tpu_custom_call.1} parent=5 // pred_fallthru
        _
    $region6: #{tpu_custom_call.1} parent=1 // loop_footer
      %s19 = sadd.s32 1, %s15
    $region7: #{tpu_custom_call.1} parent=1 // loop_footer_branch
      %14 = sbr.rel target = $region3
    $region8: #{tpu_custom_call.1} parent=1 // loop_exit
      _
    %288 = vsyncpa [#allocation3], 1
    %s289 = scalar_lea.sflag [#allocation3], 1
    %290 = vsyncpa %s289, 1
    %291 = vsyncpa [#allocation6], 1
    %292 = vsyncpa [#allocation4], 1
    %s293 = scalar_lea.sflag [#allocation4], 1
    %294 = vsyncpa %s293, 1

</llo_original>
